<compile_context>
chip_gen: v7x
topology: tpu7x:2x2x1
jax: 0.10.0
libtpu: 0.0.40
codegen_flags: <defaults>
</compile_context>

<pallas_src>
import functools

import jax
import jax.numpy as jnp
from jax.experimental import pallas as pl
from jax.experimental.pallas import tpu as pltpu

_LANE = 128
_SUB = 8


def _round_up(x, m):
    return (x + m - 1) // m * m


def _prenet_fused_kernel(seed_ref, x_ref, *refs, num_layers, dropout_rate,
                         block_m, use_hw_prng):
    """Fused pre-net: num_layers x (Linear -> ReLU -> Dropout) on one row tile."""
    o_ref = refs[-1]
    wb = refs[:-1]                      # (w0, b0, w1, b1, ...)

    if dropout_rate > 0.0:
        # Exact P(keep) = 1 - p via uint32 threshold compare.
        threshold = jnp.uint32(min(int(round(dropout_rate * (1 << 32))), (1 << 32) - 1))
        scale = jnp.float32(1.0 / (1.0 - dropout_rate))
        if use_hw_prng:
            # Hardware PRNG: per-tile seed; per-layer decorrelation comes from the
            # state advancing on every prng_random_bits() call.
            pltpu.prng_seed(seed_ref[0], pl.program_id(0))
        else:
            # Non-TPU fallback: cheap counter hash, one mix round, counter base
            # hoisted out of the layer loop (all layer outputs share one shape).
            d_out_p = wb[1].shape[-1]
            row0 = pl.program_id(0) * block_m
            rows = jax.lax.broadcasted_iota(jnp.int32, (block_m, d_out_p), 0) + row0
            cols = jax.lax.broadcasted_iota(jnp.int32, (block_m, d_out_p), 1)
            base = (rows * d_out_p + cols).astype(jnp.uint32) ^ seed_ref[0].astype(jnp.uint32)

    h = x_ref[...]
    if h.dtype != jnp.bfloat16:
        h = h.astype(jnp.bfloat16)      # MXU operand

    for li in range(num_layers):
        w = wb[2 * li][...]             # bf16 (d_prev_p, d_out_p), VMEM-resident
        b = wb[2 * li + 1][...]         # f32  (1, d_out_p),        VMEM-resident
        y = jnp.dot(h, w, preferred_element_type=jnp.float32)     # MXU, f32 accumulate
        y = jnp.maximum(y + b, 0.0)                               # bias + ReLU (VPU)
        if dropout_rate > 0.0:
            if use_hw_prng:
                bits = pltpu.prng_random_bits(y.shape)
                if bits.dtype != jnp.uint32:
                    bits = pltpu.bitcast(bits, jnp.uint32)
            else:
                salt = jnp.uint32((0x9E3779B9 * (li + 1)) & 0xFFFFFFFF)
                bits = base ^ salt
                bits = bits ^ (bits >> 16)
                bits = bits * jnp.uint32(0x7FEB352D)
                bits = bits ^ (bits >> 15)
            y = jnp.where(bits >= threshold, y * scale, 0.0)
        h = y.astype(jnp.bfloat16) if li + 1 < num_layers else y

    o_ref[...] = h.astype(o_ref.dtype)


def init_prenet_params(key, input_dim, output_dim, num_layers):
    """torch.nn.Linear-style init; weights stored (in, out) so the kernel does x @ W."""
    params = []
    d_in = input_dim
    for _ in range(num_layers):
        key, kw, kb = jax.random.split(key, 3)
        bound = 1.0 / (d_in ** 0.5)
        w = jax.random.uniform(kw, (d_in, output_dim), jnp.float32, -bound, bound)
        b = jax.random.uniform(kb, (output_dim,), jnp.float32, -bound, bound)
        params.append((w, b))
        d_in = output_dim
    return params


def prenet_forward(x, params, dropout_rate, seed=0, block_m=2048,
                   out_dtype=jnp.bfloat16):
    """x: (B, T, D_in) -> (B, T, D_out). Dropout is always on (training=True), as in Prenet.

    out_dtype defaults to bf16 (halves the dominant HBM stream); pass jnp.float32
    for a full-precision output.
    """
    B, T, D_in = x.shape
    num_layers = len(params)
    D_out = params[-1][0].shape[1]

    M = B * T
    d_in_p = _round_up(D_in, _LANE)
    d_out_p = _round_up(D_out, _LANE)
    m8 = _round_up(M, _SUB)

    # Row tile: as big as possible (amortizes ~0.35us/step pipeline overhead) but
    # (a) within a conservative VMEM budget (double-buffered in/out tiles + f32
    #     intermediates), and (b) leaving >= 2 grid steps so both v7x
    #     TensorCores get work.
    out_bytes = jnp.dtype(out_dtype).itemsize
    bytes_per_row = 2 * (2 * d_in_p) + 2 * (out_bytes * d_out_p) + 8 * d_out_p
    tm_cap = max(_SUB, (24 * 1024 * 1024 // bytes_per_row) // _SUB * _SUB)
    tm = min(block_m, m8, tm_cap)
    if m8 // tm < 2 and m8 >= 2 * _SUB:
        tm = _round_up((m8 + 1) // 2, _SUB)
    m_p = pl.cdiv(m8, tm) * tm

    # Input: skip the wrapper-side pad/cast HBM pass when shapes are already
    # aligned; the kernel casts to bf16 on the fly in that case.
    x2 = x.reshape(M, D_in)
    if (m_p != M) or (d_in_p != D_in):
        x2 = jnp.pad(x2.astype(jnp.bfloat16), ((0, m_p - M), (0, d_in_p - D_in)))

    # Weights/biases: zero-padded to lane multiples (exact: padded lanes stay 0
    # through bias/ReLU/dropout), weights bf16 for the MXU, biases f32.
    # VMEM-resident for the whole grid (index_map -> (0, 0)).
    flat_params = []
    in_specs = [pl.BlockSpec((tm, d_in_p), lambda i, s: (i, 0))]   # x tile (pipelined)
    d_prev_p = d_in_p
    for (w, b) in params:
        wi, wo = w.shape
        w_p = jnp.pad(w, ((0, d_prev_p - wi), (0, d_out_p - wo))).astype(jnp.bfloat16)
        b_p = jnp.pad(b.reshape(1, -1), ((0, 0), (0, d_out_p - wo))).astype(jnp.float32)
        flat_params += [w_p, b_p]
        in_specs.append(pl.BlockSpec((d_prev_p, d_out_p), lambda i, s: (0, 0)))
        in_specs.append(pl.BlockSpec((1, d_out_p), lambda i, s: (0, 0)))
        d_prev_p = d_out_p

    kernel = functools.partial(
        _prenet_fused_kernel,
        num_layers=num_layers,
        dropout_rate=float(dropout_rate),
        block_m=tm,
        use_hw_prng=(jax.default_backend() == "tpu"),
    )

    seed_arr = jnp.asarray([seed], dtype=jnp.int32)
    out = pl.pallas_call(
        kernel,
        out_shape=jax.ShapeDtypeStruct((m_p, d_out_p), out_dtype),
        grid_spec=pltpu.PrefetchScalarGridSpec(
            num_scalar_prefetch=1,            # seed -> SMEM
            grid=(m_p // tm,),                # tile the B*T rows
            in_specs=in_specs,
            out_specs=pl.BlockSpec((tm, d_out_p), lambda i, s: (i, 0)),
        ),
        compiler_params=pltpu.CompilerParams(
            dimension_semantics=("parallel",),     # v7x megacore shards the row axis
            vmem_limit_bytes=32 * 1024 * 1024,     # headroom; working set << 32 MiB
        ),
    )(seed_arr, x2, *flat_params)

    # No-op slice/reshape when shapes were already aligned.
    return out[:M, :D_out].reshape(B, T, D_out)


if __name__ == "__main__":
    # Small shapes: batch=2, seq=8, input_dim=32, output_dim=32, 2 layers, p=0.5
    B, T, D_IN, D_OUT = 2, 8, 32, 32
    NUM_LAYERS = 2
    DROPOUT = 0.5

    key = jax.random.PRNGKey(0)
    key, kx = jax.random.split(key)
    x = jax.random.normal(kx, (B, T, D_IN), dtype=jnp.float32)
    params = init_prenet_params(key, D_IN, D_OUT, NUM_LAYERS)

    out = prenet_forward(x, params, DROPOUT, seed=1234)
    out = jax.block_until_ready(out)

    assert out.shape == (B, T, D_OUT), out.shape
    out_f32 = out.astype(jnp.float32)
    # ReLU + (zero-or-scaled) dropout -> all outputs non-negative and finite.
    assert bool(jnp.all(out_f32 >= 0.0))
    assert bool(jnp.all(jnp.isfinite(out_f32)))

    print("KERNEL_OK")
</pallas_src>

<mosaic_0001>
module attributes {stable_mosaic.version = 11 : i64} {
  func.func @_prenet_fused_kernel(%arg0: i32, %arg1: memref<1xi32, #tpu.memory_space<smem>>, %arg2: memref<8x128xbf16, #tpu.memory_space<vmem>>, %arg3: memref<128x128xbf16, #tpu.memory_space<vmem>>, %arg4: memref<1x128xf32, #tpu.memory_space<vmem>>, %arg5: memref<128x128xbf16, #tpu.memory_space<vmem>>, %arg6: memref<1x128xf32, #tpu.memory_space<vmem>>, %arg7: memref<8x128xbf16, #tpu.memory_space<vmem>>) attributes {dimension_semantics = [#tpu.dimension_semantics<parallel>], iteration_bounds = array<i64: 2>, scalar_prefetch = 1 : i64, scratch_operands = 0 : i64, tpu.core_type = #tpu.core_type<tc>, window_params = [{transform_indices = @transform_0, window_bounds = array<i64: 8, 128>}, {pipeline_mode = #tpu.pipeline_mode<synchronous>, transform_indices = @transform_1, window_bounds = array<i64: 128, 128>}, {pipeline_mode = #tpu.pipeline_mode<synchronous>, transform_indices = @transform_2, window_bounds = array<i64: 1, 128>}, {pipeline_mode = #tpu.pipeline_mode<synchronous>, transform_indices = @transform_3, window_bounds = array<i64: 128, 128>}, {pipeline_mode = #tpu.pipeline_mode<synchronous>, transform_indices = @transform_4, window_bounds = array<i64: 1, 128>}, {transform_indices = @transform_5, window_bounds = array<i64: 8, 128>}]} {
    %c8_i32 = arith.constant 8 : i32
    %0 = arith.muli %arg0, %c8_i32 : i32
    %1 = tpu.iota {dimensions = array<i32: 0>} : vector<8x128xi32>
    %2 = vector.broadcast %0 : i32 to vector<8x128xi32>
    %3 = arith.addi %1, %2 : vector<8x128xi32>
    %4 = tpu.iota {dimensions = array<i32: 1>} : vector<8x128xi32>
    %c128_i32 = arith.constant 128 : i32
    %5 = vector.broadcast %c128_i32 : i32 to vector<8x128xi32>
    %6 = arith.muli %3, %5 : vector<8x128xi32>
    %7 = arith.addi %6, %4 : vector<8x128xi32>
    %c0 = arith.constant 0 : index
    %8 = memref.load %arg1[%c0] : memref<1xi32, #tpu.memory_space<smem>>
    %9 = vector.broadcast %8 : i32 to vector<8x128xi32>
    %10 = arith.xori %7, %9 : vector<8x128xi32>
    %c0_0 = arith.constant 0 : index
    %c0_1 = arith.constant 0 : index
    %11 = vector.load %arg2[%c0_0, %c0_1] : memref<8x128xbf16, #tpu.memory_space<vmem>>, vector<8x128xbf16>
    %c0_2 = arith.constant 0 : index
    %c0_3 = arith.constant 0 : index
    %12 = vector.load %arg3[%c0_2, %c0_3] : memref<128x128xbf16, #tpu.memory_space<vmem>>, vector<128x128xbf16>
    %c0_4 = arith.constant 0 : index
    %c0_5 = arith.constant 0 : index
    %13 = vector.load %arg4[%c0_4, %c0_5] : memref<1x128xf32, #tpu.memory_space<vmem>>, vector<1x128xf32>
    %cst = arith.constant dense<0.000000e+00> : vector<8x128xf32>
    %14 = tpu.matmul %11, %12, %cst {dimension_numbers = #tpu.dot_dimension_numbers<[1], [0], [0], [1], [0, 0, 1, 1], [], []>} : vector<8x128xbf16>, vector<128x128xbf16>, vector<8x128xf32> -> vector<8x128xf32>
    %15 = vector.broadcast %13 : vector<1x128xf32> to vector<8x128xf32>
    %16 = arith.addf %14, %15 : vector<8x128xf32>
    %cst_6 = arith.constant 0.000000e+00 : f32
    %17 = vector.broadcast %cst_6 : f32 to vector<8x128xf32>
    %18 = arith.maximumf %16, %17 : vector<8x128xf32>
    %c-1640531527_i32 = arith.constant -1640531527 : i32
    %19 = vector.broadcast %c-1640531527_i32 : i32 to vector<8x128xi32>
    %20 = arith.xori %10, %19 : vector<8x128xi32>
    %c16_i32 = arith.constant 16 : i32
    %21 = vector.broadcast %c16_i32 : i32 to vector<8x128xi32>
    %22 = arith.shrui %20, %21 : vector<8x128xi32>
    %23 = arith.xori %20, %22 : vector<8x128xi32>
    %c2146121005_i32 = arith.constant 2146121005 : i32
    %24 = vector.broadcast %c2146121005_i32 : i32 to vector<8x128xi32>
    %25 = arith.muli %23, %24 : vector<8x128xi32>
    %c15_i32 = arith.constant 15 : i32
    %26 = vector.broadcast %c15_i32 : i32 to vector<8x128xi32>
    %27 = arith.shrui %25, %26 : vector<8x128xi32>
    %28 = arith.xori %25, %27 : vector<8x128xi32>
    %c-2147483648_i32 = arith.constant -2147483648 : i32
    %29 = vector.broadcast %c-2147483648_i32 : i32 to vector<8x128xi32>
    %30 = arith.cmpi uge, %28, %29 : vector<8x128xi32>
    %cst_7 = arith.constant 2.000000e+00 : f32
    %31 = vector.broadcast %cst_7 : f32 to vector<8x128xf32>
    %32 = arith.mulf %18, %31 : vector<8x128xf32>
    %cst_8 = arith.constant 0.000000e+00 : f32
    %33 = vector.broadcast %cst_8 : f32 to vector<8x128xf32>
    %34 = arith.select %30, %32, %33 : vector<8x128xi1>, vector<8x128xf32>
    %35 = arith.truncf %34 : vector<8x128xf32> to vector<8x128xbf16>
    %c0_9 = arith.constant 0 : index
    %c0_10 = arith.constant 0 : index
    %36 = vector.load %arg5[%c0_9, %c0_10] : memref<128x128xbf16, #tpu.memory_space<vmem>>, vector<128x128xbf16>
    %c0_11 = arith.constant 0 : index
    %c0_12 = arith.constant 0 : index
    %37 = vector.load %arg6[%c0_11, %c0_12] : memref<1x128xf32, #tpu.memory_space<vmem>>, vector<1x128xf32>
    %cst_13 = arith.constant dense<0.000000e+00> : vector<8x128xf32>
    %38 = tpu.matmul %35, %36, %cst_13 {dimension_numbers = #tpu.dot_dimension_numbers<[1], [0], [0], [1], [0, 0, 1, 1], [], []>} : vector<8x128xbf16>, vector<128x128xbf16>, vector<8x128xf32> -> vector<8x128xf32>
    %39 = vector.broadcast %37 : vector<1x128xf32> to vector<8x128xf32>
    %40 = arith.addf %38, %39 : vector<8x128xf32>
    %cst_14 = arith.constant 0.000000e+00 : f32
    %41 = vector.broadcast %cst_14 : f32 to vector<8x128xf32>
    %42 = arith.maximumf %40, %41 : vector<8x128xf32>
    %c1013904242_i32 = arith.constant 1013904242 : i32
    %43 = vector.broadcast %c1013904242_i32 : i32 to vector<8x128xi32>
    %44 = arith.xori %10, %43 : vector<8x128xi32>
    %c16_i32_15 = arith.constant 16 : i32
    %45 = vector.broadcast %c16_i32_15 : i32 to vector<8x128xi32>
    %46 = arith.shrui %44, %45 : vector<8x128xi32>
    %47 = arith.xori %44, %46 : vector<8x128xi32>
    %c2146121005_i32_16 = arith.constant 2146121005 : i32
    %48 = vector.broadcast %c2146121005_i32_16 : i32 to vector<8x128xi32>
    %49 = arith.muli %47, %48 : vector<8x128xi32>
    %c15_i32_17 = arith.constant 15 : i32
    %50 = vector.broadcast %c15_i32_17 : i32 to vector<8x128xi32>
    %51 = arith.shrui %49, %50 : vector<8x128xi32>
    %52 = arith.xori %49, %51 : vector<8x128xi32>
    %c-2147483648_i32_18 = arith.constant -2147483648 : i32
    %53 = vector.broadcast %c-2147483648_i32_18 : i32 to vector<8x128xi32>
    %54 = arith.cmpi uge, %52, %53 : vector<8x128xi32>
    %cst_19 = arith.constant 2.000000e+00 : f32
    %55 = vector.broadcast %cst_19 : f32 to vector<8x128xf32>
    %56 = arith.mulf %42, %55 : vector<8x128xf32>
    %cst_20 = arith.constant 0.000000e+00 : f32
    %57 = vector.broadcast %cst_20 : f32 to vector<8x128xf32>
    %58 = arith.select %54, %56, %57 : vector<8x128xi1>, vector<8x128xf32>
    %59 = arith.truncf %58 : vector<8x128xf32> to vector<8x128xbf16>
    %c0_21 = arith.constant 0 : index
    %c0_22 = arith.constant 0 : index
    %60 = vector.load %arg7[%c0_21, %c0_22] : memref<8x128xbf16, #tpu.memory_space<vmem>>, vector<8x128xbf16>
    tpu.vector_store %arg7[%c0_21, %c0_22], %59 {strides = array<i32>} : memref<8x128xbf16, #tpu.memory_space<vmem>>, vector<8x128xbf16>,
    return
  }
  func.func @transform_0(%arg0: i32, %arg1: memref<1xi32, #tpu.memory_space<smem>>) -> (i32, i32) {
    %c0_i32 = arith.constant 0 : i32
    %c0_i32_0 = arith.constant 0 : i32
    return %arg0, %c0_i32 : i32, i32
  }
  func.func @transform_1(%arg0: i32, %arg1: memref<1xi32, #tpu.memory_space<smem>>) -> (i32, i32) {
    %c0_i32 = arith.constant 0 : i32
    %c0_i32_0 = arith.constant 0 : i32
    %c0_i32_1 = arith.constant 0 : i32
    return %c0_i32, %c0_i32_0 : i32, i32
  }
  func.func @transform_2(%arg0: i32, %arg1: memref<1xi32, #tpu.memory_space<smem>>) -> (i32, i32) {
    %c0_i32 = arith.constant 0 : i32
    %c0_i32_0 = arith.constant 0 : i32
    %c0_i32_1 = arith.constant 0 : i32
    return %c0_i32, %c0_i32_0 : i32, i32
  }
  func.func @transform_3(%arg0: i32, %arg1: memref<1xi32, #tpu.memory_space<smem>>) -> (i32, i32) {
    %c0_i32 = arith.constant 0 : i32
    %c0_i32_0 = arith.constant 0 : i32
    %c0_i32_1 = arith.constant 0 : i32
    return %c0_i32, %c0_i32_0 : i32, i32
  }
  func.func @transform_4(%arg0: i32, %arg1: memref<1xi32, #tpu.memory_space<smem>>) -> (i32, i32) {
    %c0_i32 = arith.constant 0 : i32
    %c0_i32_0 = arith.constant 0 : i32
    %c0_i32_1 = arith.constant 0 : i32
    return %c0_i32, %c0_i32_0 : i32, i32
  }
  func.func @transform_5(%arg0: i32, %arg1: memref<1xi32, #tpu.memory_space<smem>>) -> (i32, i32) {
    %c0_i32 = arith.constant 0 : i32
    %c0_i32_0 = arith.constant 0 : i32
    return %arg0, %c0_i32 : i32, i32
  }
}

</mosaic_0001>

<llo_original>
// kernel: tpu_custom_call.1
$region0: #{tpu_custom_call.1}
  #allocation0 [shape = 'u32[]', space=smem, size = 0x4, offset = 0x4, fixed_abs, tag = 'smem constant byte address 0x4 - core index']
  #allocation1 [shape = 'u32[144,128]{1,0:T(1,128)}', space=vmem, size = 0x12000, scoped, tag = 'internal scratch']
  #allocation2 [shape = 's32[1]{0}', space=sflag, size = 0x4, scoped, tag = 'scoped memory for tpu_custom_call.1']
  #allocation3 [shape = 's32[1]{0:T(128)S(6)}', space=smem, size = 0x200, scoped, tag = 'prefetched SMEM operand 0']
  %s0 = inlined_call_operand.<no memory space> [shape: s32[1], index: 0, kind: input, shape index: {}]
  %s1 = inlined_call_operand.hbm [shape: bf16[16,128], index: 1, kind: input, shape index: {}]
  %s2 = inlined_call_operand.hbm [shape: bf16[128,128], index: 2, kind: input, shape index: {}]
  %s3 = inlined_call_operand.vmem [shape: f32[1,128], index: 3, kind: input, shape index: {}]
  %s4 = inlined_call_operand.hbm [shape: bf16[128,128], index: 4, kind: input, shape index: {}]
  %s5 = inlined_call_operand.vmem [shape: f32[1,128], index: 5, kind: input, shape index: {}]
  %s6 = inlined_call_operand.hbm [shape: bf16[16,128], index: 6, kind: output, shape index: {}]
  %s7 = sld [smem:[#allocation0]]
  $region65: #{tpu_custom_call.1} parent=0
    _
  %s9 = ssub.s32 1, %s7
  %s10 = scalar_select 0, %s9, %s7
  %11 = sst [smem:[#allocation3]] %s0
  $region1: #{tpu_custom_call.1} parent=0
    #allocation4 [shape = 'u8[4096]{0}', space=vmem, size = 0x1000, scoped, tag = 'input window, operand 1']
    #allocation5 [shape = 's32[2]{0}', space=sflag, size = 0x8, scoped, tag = 'scoped memory for tpu_custom_call.1']
    #allocation6 [shape = 's32[2]{0}', space=sflag, size = 0x8, scoped, tag = 'scoped memory for tpu_custom_call.1']
    #allocation7 [shape = 'u8[32768]{0}', space=vmem, size = 0x8000, scoped, tag = 'input window, operand 2, single buffered']
    #allocation8 [shape = 's32[1]{0}', space=sflag, size = 0x4, scoped, tag = 'scoped memory for tpu_custom_call.1']
    #allocation9 [shape = 'u8[32768]{0}', space=vmem, size = 0x8000, scoped, tag = 'input window, operand 4, single buffered']
    #allocation10 [shape = 'u8[4096]{0}', space=vmem, size = 0x1000, scoped, tag = 'output window, operand 0']
    %12 = vsyncpa [#allocation5], 0
    %s13 = scalar_lea.sflag [#allocation5], 1
    %14 = vsyncpa %s13, 0
    %15 = vsyncpa [#allocation8], 0
    %16 = vsyncpa [#allocation6], 0
    %s17 = scalar_lea.sflag [#allocation6], 1
    %18 = vsyncpa %s17, 0
    loop: start=0, step=1, limit=4
    $region2: #{tpu_custom_call.1} parent=1 // loop_pre_header
      _
    $region3: #{tpu_custom_call.1} parent=1 // loop_header
      %s20 = sphi 0, %s24
      %p21 = scmp.ge.s32.totalorder %s20, 4
      %s30 = sphi 0, %s32
      %s33 = sphi 0, %s30
      %s34 = sphi 0, %s33
      %s50 = sphi 0, %s34
      %s54 = sphi 0, %s54
      %s56 = sphi 0, %s54
      %s57 = sphi 0, %s56
      %s71 = sphi 0, %s57
      %s75 = sphi 0, %s75
      %s77 = sphi 0, %s75
      %s78 = sphi 0, %s77
      %s92 = sphi 0, %s78
      %s96 = sphi 0, %s96
      %s98 = sphi 0, %s96
      %s99 = sphi 0, %s98
      %s113 = sphi 0, %s99
      %s117 = sphi 0, %s117
      %s119 = sphi 0, %s117
      %s120 = sphi 0, %s119
      %s134 = sphi 0, %s120
      %s140 = sphi 0, %s142
      %s143 = sphi 0, %s140
      %s144 = sphi 0, %s143
      %s160 = sphi 0, %s144
    $region4: #{tpu_custom_call.1} parent=1 // loop_header_branch
      %23 = sbr.rel (%p21) target = $region8
    $region5: #{tpu_custom_call.1} parent=1 // loop_body
      %s25 = ssub.s32 %s20, 1
      %s26 = ssub.s32 %s20, 2
      %s27 = sadd.s32 %s20, 1
      %s28 = ssub.s32 %s20, %s27
      %p29 = scmp.eq.s32.totalorder %s28, 0
      %s31 = sadd.s32 %s30, 1
      %s32 = scalar_select %p29, %s30, %s31
      %p35 = pneg %p29
      %p36 = scmp.eq.s32.totalorder %s20, 1
      %p37 = por %p35, %p36
      %p38 = scmp.ne.s32.totalorder %s30, %s33
      %p39 = scmp.eq.s32.totalorder %s20, 0
      %p40 = por %p38, %p39
      %p41 = scmp.ne.s32.totalorder %s30, %s33
      %p42 = scmp.eq.s32.totalorder %s25, 1
      %p43 = por %p41, %p42
      %p44 = scmp.ne.s32.totalorder %s33, %s34
      %p45 = scmp.eq.s32.totalorder %s25, 0
      %p46 = por %p44, %p45
      %p47 = scmp.ne.s32.totalorder %s33, %s34
      %p48 = scmp.eq.s32.totalorder %s26, 1
      %p49 = por %p47, %p48
      %p51 = scmp.ne.s32.totalorder %s34, %s50
      %p52 = scmp.eq.s32.totalorder %s26, 0
      %p53 = por %p51, %p52
      %s55 = sadd.s32 %s54, 1
      %p58 = scmp.eq.s32.totalorder %s20, 1
      %p59 = scmp.ne.s32.totalorder %s54, %s56
      %p60 = scmp.eq.s32.totalorder %s20, 0
      %p61 = por %p59, %p60
      %p62 = scmp.ne.s32.totalorder %s54, %s56
      %p63 = scmp.eq.s32.totalorder %s25, 1
      %p64 = por %p62, %p63
      %p65 = scmp.ne.s32.totalorder %s56, %s57
      %p66 = scmp.eq.s32.totalorder %s25, 0
      %p67 = por %p65, %p66
      %p68 = scmp.ne.s32.totalorder %s56, %s57
      %p69 = scmp.eq.s32.totalorder %s26, 1
      %p70 = por %p68, %p69
      %p72 = scmp.ne.s32.totalorder %s57, %s71
      %p73 = scmp.eq.s32.totalorder %s26, 0
      %p74 = por %p72, %p73
      %s76 = sadd.s32 %s75, 1
      %p79 = scmp.eq.s32.totalorder %s20, 1
      %p80 = scmp.ne.s32.totalorder %s75, %s77
      %p81 = scmp.eq.s32.totalorder %s20, 0
      %p82 = por %p80, %p81
      %p83 = scmp.ne.s32.totalorder %s75, %s77
      %p84 = scmp.eq.s32.totalorder %s25, 1
      %p85 = por %p83, %p84
      %p86 = scmp.ne.s32.totalorder %s77, %s78
      %p87 = scmp.eq.s32.totalorder %s25, 0
      %p88 = por %p86, %p87
      %p89 = scmp.ne.s32.totalorder %s77, %s78
      %p90 = scmp.eq.s32.totalorder %s26, 1
      %p91 = por %p89, %p90
      %p93 = scmp.ne.s32.totalorder %s78, %s92
      %p94 = scmp.eq.s32.totalorder %s26, 0
      %p95 = por %p93, %p94
      %s97 = sadd.s32 %s96, 1
      %p100 = scmp.eq.s32.totalorder %s20, 1
      %p101 = scmp.ne.s32.totalorder %s96, %s98
      %p102 = scmp.eq.s32.totalorder %s20, 0
      %p103 = por %p101, %p102
      %p104 = scmp.ne.s32.totalorder %s96, %s98
      %p105 = scmp.eq.s32.totalorder %s25, 1
      %p106 = por %p104, %p105
      %p107 = scmp.ne.s32.totalorder %s98, %s99
      %p108 = scmp.eq.s32.totalorder %s25, 0
      %p109 = por %p107, %p108
      %p110 = scmp.ne.s32.totalorder %s98, %s99
      %p111 = scmp.eq.s32.totalorder %s26, 1
      %p112 = por %p110, %p111
      %p114 = scmp.ne.s32.totalorder %s99, %s113
      %p115 = scmp.eq.s32.totalorder %s26, 0
      %p116 = por %p114, %p115
      %s118 = sadd.s32 %s117, 1
      %p121 = scmp.eq.s32.totalorder %s20, 1
      %p122 = scmp.ne.s32.totalorder %s117, %s119
      %p123 = scmp.eq.s32.totalorder %s20, 0
      %p124 = por %p122, %p123
      %p125 = scmp.ne.s32.totalorder %s117, %s119
      %p126 = scmp.eq.s32.totalorder %s25, 1
      %p127 = por %p125, %p126
      %p128 = scmp.ne.s32.totalorder %s119, %s120
      %p129 = scmp.eq.s32.totalorder %s25, 0
      %p130 = por %p128, %p129
      %p131 = scmp.ne.s32.totalorder %s119, %s120
      %p132 = scmp.eq.s32.totalorder %s26, 1
      %p133 = por %p131, %p132
      %p135 = scmp.ne.s32.totalorder %s120, %s134
      %p136 = scmp.eq.s32.totalorder %s26, 0
      %p137 = por %p135, %p136
      %s138 = ssub.s32 %s20, %s27
      %p139 = scmp.eq.s32.totalorder %s138, 0
      %s141 = sadd.s32 %s140, 1
      %s142 = scalar_select %p139, %s140, %s141
      %p145 = pneg %p139
      %p146 = scmp.eq.s32.totalorder %s20, 1
      %p147 = por %p145, %p146
      %p148 = scmp.ne.s32.totalorder %s140, %s143
      %p149 = scmp.eq.s32.totalorder %s20, 0
      %p150 = por %p148, %p149
      %p151 = scmp.ne.s32.totalorder %s140, %s143
      %p152 = scmp.eq.s32.totalorder %s25, 1
      %p153 = por %p151, %p152
      %p154 = scmp.ne.s32.totalorder %s143, %s144
      %p155 = scmp.eq.s32.totalorder %s25, 0
      %p156 = por %p154, %p155
      %p157 = scmp.ne.s32.totalorder %s143, %s144
      %p158 = scmp.eq.s32.totalorder %s26, 1
      %p159 = por %p157, %p158
      %p161 = scmp.ne.s32.totalorder %s144, %s160
      %p162 = scmp.eq.s32.totalorder %s26, 0
      %p163 = por %p161, %p162
      %p164 = scmp.le.s32.totalorder 1, %s20
      %p165 = scmp.lt.s32.totalorder %s20, 3
      %p166 = pnand %p164, %p165
      %p167 = pneg %p166
      // Predicated region
      $region9: #{tpu_custom_call.1} parent=5 // pred_check
        _
      $region10: #{tpu_custom_call.1} parent=5 // pred_check_branch
        %169 = sbr.rel (%p166) target = $region12
      $region11: #{tpu_custom_call.1} parent=5 // pred_region
        %s170 = ssub.s32 %s20, 1
        // Predicated region
        $region13: #{tpu_custom_call.1} parent=11 // pred_check
          %p171 = pneg %p67
        $region14: #{tpu_custom_call.1} parent=11 // pred_check_branch
          %173 = sbr.rel (%p171) target = $region16
        $region15: #{tpu_custom_call.1} parent=11 // pred_region
          %s175 = ssub.s32 1024, 1024
          %176 = vsyncadd [#allocation8], %s175
          %s177 = sshll.u32 [#allocation7], 4
          %s178 = int_to_ptr.vmem [resolvable:$true] %s177
          %183 = dma.hbm_to_vmem [thread:$0]  %s2, 1024, %s178, [#allocation8], 64, 64, 4
        $region16: #{tpu_custom_call.1} parent=11 // pred_fallthru
          _
        // Predicated region
        $region17: #{tpu_custom_call.1} parent=11 // pred_check
          %p184 = pneg %p88
        $region18: #{tpu_custom_call.1} parent=11 // pred_check_branch
          %186 = sbr.rel (%p184) target = $region20
        $region19: #{tpu_custom_call.1} parent=11 // pred_region
          _
        $region20: #{tpu_custom_call.1} parent=11 // pred_fallthru
          _
        // Predicated region
        $region21: #{tpu_custom_call.1} parent=11 // pred_check
          %p187 = pneg %p109
        $region22: #{tpu_custom_call.1} parent=11 // pred_check_branch
          %189 = sbr.rel (%p187) target = $region24
        $region23: #{tpu_custom_call.1} parent=11 // pred_region
          %s191 = ssub.s32 1024, 1024
          %192 = vsyncadd [#allocation8], %s191
          %s193 = sshll.u32 [#allocation9], 4
          %s194 = int_to_ptr.vmem [resolvable:$true] %s193
          %199 = dma.hbm_to_vmem [thread:$0]  %s4, 1024, %s194, [#allocation8], 64, 64, 4
        $region24: #{tpu_custom_call.1} parent=11 // pred_fallthru
          _
        // Predicated region
        $region25: #{tpu_custom_call.1} parent=11 // pred_check
          %p200 = pneg %p130
        $region26: #{tpu_custom_call.1} parent=11 // pred_check_branch
          %202 = sbr.rel (%p200) target = $region28
        $region27: #{tpu_custom_call.1} parent=11 // pred_region
          _
        $region28: #{tpu_custom_call.1} parent=11 // pred_fallthru
          _
      $region12: #{tpu_custom_call.1} parent=5 // pred_fallthru
        _
      %p203 = scmp.lt.s32.totalorder %s20, 2
      // Predicated region
      $region29: #{tpu_custom_call.1} parent=5 // pred_check
        %p204 = pneg %p203
      $region30: #{tpu_custom_call.1} parent=5 // pred_check_branch
        %206 = sbr.rel (%p204) target = $region32
      $region31: #{tpu_custom_call.1} parent=5 // pred_region
        // Predicated region
        $region33: #{tpu_custom_call.1} parent=31 // pred_check
          %p207 = pneg %p40
        $region34: #{tpu_custom_call.1} parent=31 // pred_check_branch
          %209 = sbr.rel (%p207) target = $region36
        $region35: #{tpu_custom_call.1} parent=31 // pred_region
          %s210 = sand.u32 %s30, 1
          %s211 = scalar_lea.sflag [#allocation5], %s210
          %s212 = sand.u32 %s30, 1
          %s213 = smul.addr %s212, 4
          %s214 = scalar_lea.vmem [#allocation4], %s213
          %s216 = ssub.s32 64, 64
          %217 = vsyncadd %s211, %s216
          %s218 = smul.addr %s20, 64
          %s219 = scalar_lea.hbm %s1, %s218
          %s221 = sshll.u32 %s214, 4
          %s222 = int_to_ptr.vmem [resolvable:$true] %s221
          %224 = dma.hbm_to_vmem [thread:$0]  %s219, 64, %s222, %s211
        $region36: #{tpu_custom_call.1} parent=31 // pred_fallthru
          _
      $region32: #{tpu_custom_call.1} parent=5 // pred_fallthru
        _
      %p225 = scmp.le.s32.totalorder 1, %s20
      %p226 = scmp.lt.s32.totalorder %s20, 3
      %p227 = pnand %p225, %p226
      %p228 = pneg %p227
      // Predicated region
      $region37: #{tpu_custom_call.1} parent=5 // pred_check
        _
      $region38: #{tpu_custom_call.1} parent=5 // pred_check_branch
        %230 = sbr.rel (%p227) target = $region40
      $region39: #{tpu_custom_call.1} parent=5 // pred_region
        %s231 = ssub.s32 %s20, 1
        %s232 = sand.u32 %s33, 1
        %s233 = scalar_lea.sflag [#allocation5], %s232
        %s234 = sand.u32 %s33, 1
        %s235 = smul.addr %s234, 4
        %s236 = scalar_lea.vmem [#allocation4], %s235
        // Predicated region
        $region41: #{tpu_custom_call.1} parent=39 // pred_check
          %p237 = pneg %p46
        $region42: #{tpu_custom_call.1} parent=39 // pred_check_branch
          %239 = sbr.rel (%p237) target = $region44
        $region43: #{tpu_custom_call.1} parent=39 // pred_region
          %240 = dma.done %s233, 64
        $region44: #{tpu_custom_call.1} parent=39 // pred_fallthru
          _
        // Predicated region
        $region45: #{tpu_custom_call.1} parent=39 // pred_check
          %p241 = pneg %p67
        $region46: #{tpu_custom_call.1} parent=39 // pred_check_branch
          %243 = sbr.rel (%p241) target = $region48
        $region47: #{tpu_custom_call.1} parent=39 // pred_region
          %244 = dma.done [#allocation8], 1024
        $region48: #{tpu_custom_call.1} parent=39 // pred_fallthru
          _
        // Predicated region
        $region49: #{tpu_custom_call.1} parent=39 // pred_check
          %p245 = pneg %p109
        $region50: #{tpu_custom_call.1} parent=39 // pred_check_branch
          %247 = sbr.rel (%p245) target = $region52
        $region51: #{tpu_custom_call.1} parent=39 // pred_region
          %248 = dma.done [#allocation8], 1024
        $region52: #{tpu_custom_call.1} parent=39 // pred_fallthru
          _
        %s249 = sand.u32 %s33, 1
        %s250 = scalar_lea.sflag [#allocation5], %s249
        %s251 = sand.u32 %s33, 1
        %s252 = smul.addr %s251, 4
        %s253 = scalar_lea.vmem [#allocation4], %s252
        %p254 = pneg %p46
        %p255 = pneg %p43
        %p256 = pneg %p67
        %p257 = pneg %p64
        %p258 = pneg %p88
        %p259 = pneg %p85
        %p260 = pneg %p109
        %p261 = pneg %p106
        %p262 = pneg %p130
        %p263 = pneg %p127
        %p264 = pneg %p156
        %p265 = pneg %p153
        %s266 = sand.u32 %s143, 1
        %s267 = scalar_lea.sflag [#allocation6], %s266
        %s268 = sand.u32 %s143, 1
        %s269 = smul.addr %s268, 4
        %s270 = scalar_lea.vmem [#allocation10], %s269
        %s272 = smul.u32 %s25, 8
        %v273 = vlaneseq
        %v274 = vshrl.u32 %v273, 7
        %v275 = vstv %s272
        %v276 = vadd.s32 %v274, %v275
        %v277 = vlaneseq
        %v278 = vand.u32 %v277, 127
        %v279 = vmul.u32 %v276, 128
        %v280 = vadd.s32 %v279, %v278
        %s281 = sld [smem:[#allocation3]]
        %v282 = vstv %s281
        %v283 = vxor.u32 %v280, %v282
        %v284 = vld [vmem:[%s236] sm:$0xf]
        %v285 = vld [vmem:[#allocation7] sm:$0xf]
        %v286 = vld [vmem:[#allocation7 + $0x4] sm:$0xf]
        %v287 = vld [vmem:[#allocation7 + $0x8] sm:$0xf]
        %v288 = vld [vmem:[#allocation7 + $0xc] sm:$0xf]
        %v289 = vld [vmem:[#allocation7 + $0x10] sm:$0xf]
        %v290 = vld [vmem:[#allocation7 + $0x14] sm:$0xf]
        %v291 = vld [vmem:[#allocation7 + $0x18] sm:$0xf]
        %v292 = vld [vmem:[#allocation7 + $0x1c] sm:$0xf]
        %v293 = vld [vmem:[#allocation7 + $0x20] sm:$0xf]
        %v294 = vld [vmem:[#allocation7 + $0x24] sm:$0xf]
        %v295 = vld [vmem:[#allocation7 + $0x28] sm:$0xf]
        %v296 = vld [vmem:[#allocation7 + $0x2c] sm:$0xf]
        %v297 = vld [vmem:[#allocation7 + $0x30] sm:$0xf]
        %v298 = vld [vmem:[#allocation7 + $0x34] sm:$0xf]
        %v299 = vld [vmem:[#allocation7 + $0x38] sm:$0xf]
        %v300 = vld [vmem:[#allocation7 + $0x3c] sm:$0xf]
        %v301 = vld [vmem:[%s3] sm:$0x1]
        %v303 = vlaneseq
        %v304 = vshrl.u32 %v303, 7
        %v305 = vsub.s32 0, %v304
        %v306 = vrot.slane %v301, %v305
        %v324 = vunpack.c.l.b16 %v285
        %v325 = vunpack.c.l.b16 %v286
        %v326 = vunpack.c.l.b16 %v287
        %v327 = vunpack.c.l.b16 %v288
        %v328 = vunpack.c.l.b16 %v289
        %v329 = vunpack.c.l.b16 %v290
        %v330 = vunpack.c.l.b16 %v291
        %v331 = vunpack.c.l.b16 %v292
        %v332 = vunpack.c.l.b16 %v293
        %v333 = vunpack.c.l.b16 %v294
        %v334 = vunpack.c.l.b16 %v295
        %v335 = vunpack.c.l.b16 %v296
        %v336 = vunpack.c.l.b16 %v297
        %v337 = vunpack.c.l.b16 %v298
        %v338 = vunpack.c.l.b16 %v299
        %v339 = vunpack.c.l.b16 %v300
        %v340 = vpack.c.b16 %v325, %v324
        %v341 = vpack.c.b16 %v327, %v326
        %v342 = vpack.c.b16 %v329, %v328
        %v343 = vpack.c.b16 %v331, %v330
        %v344 = vpack.c.b16 %v333, %v332
        %v345 = vpack.c.b16 %v335, %v334
        %v346 = vpack.c.b16 %v337, %v336
        %v347 = vpack.c.b16 %v339, %v338
        %356 = vmatprep.subr.bf16.mxu0 0
        %357 = vmatpush1.bf16.msra.mxu0 %v340
        %358 = vmatprep.subr.bf16.mxu0 0
        %359 = vmatpush1.bf16.msra.mxu0 %v341
        %360 = vmatprep.subr.bf16.mxu0 0
        %361 = vmatpush1.bf16.msra.mxu0 %v342
        %362 = vmatprep.subr.bf16.mxu0 0
        %363 = vmatpush1.bf16.msra.mxu0 %v343
        %364 = vmatprep.subr.bf16.mxu0 0
        %365 = vmatpush1.bf16.msra.mxu0 %v344
        %366 = vmatprep.subr.bf16.mxu0 0
        %367 = vmatpush1.bf16.msra.mxu0 %v345
        %368 = vmatprep.subr.bf16.mxu0 0
        %369 = vmatpush1.bf16.msra.mxu0 %v346
        %370 = vmatprep.subr.bf16.mxu0 0
        %371 = vmatpush1.bf16.msra.mxu0 %v347
        %372 = vmatprep.subr.bf16.mxu0 0
        %373 = vmatpush1.bf16.msra.mxu0 0
        %374 = vmatprep.subr.bf16.mxu0 0
        %375 = vmatpush1.bf16.msra.mxu0 0
        %376 = vmatprep.subr.bf16.mxu0 0
        %377 = vmatpush1.bf16.msra.mxu0 0
        %378 = vmatprep.subr.bf16.mxu0 0
        %379 = vmatpush1.bf16.msra.mxu0 0
        %380 = vmatprep.subr.bf16.mxu0 0
        %381 = vmatpush1.bf16.msra.mxu0 0
        %382 = vmatprep.subr.bf16.mxu0 0
        %383 = vmatpush1.bf16.msra.mxu0 0
        %384 = vmatprep.subr.bf16.mxu0 0
        %385 = vmatpush1.bf16.msra.mxu0 0
        %386 = vmatprep.subr.bf16.mxu0 0
        %387 = vmatpush1.bf16.msra.mxu0 0
        %388 = vmatprep.mubr.bf16.mxu0 0
        %389 = vmatmul.mubr.bf16.gmra.mrb[0].mxu0 %v284
        %v390 = vpop.f32.mrb[0].mxu0
        %v391 = vadd.f32 %v306, %v390
        %v392 = vpop.f32.mrb[0].mxu0
        %v393 = vpop.f32.mrb[0].mxu0
        %v394 = vpop.f32.mrb[0].mxu0
        %395 = vdwg.mxu0
        %v396 = vmax.f32 %v391, 0.0
        %v397 = vxor.u32 %v283, 2654435769
        %v398 = vshrl.u32 %v397, 16
        %v399 = vxor.u32 %v397, %v398
        %v400 = vmul.u32 %v399, 2146121005
        %v401 = vshrl.u32 %v400, 15
        %v402 = vxor.u32 %v400, %v401
        %vm403 = vcmp.ge.u32.totalorder %v402, 2147483648
        %v404 = vmul.f32 %v396, 2.0
        %v405 = vsel %vm403, %v404, 0.0
        %v406 = vpack.c.bf16 %v405, %v405
        %v407 = vld [vmem:[#allocation9] sm:$0xf]
        %v408 = vld [vmem:[#allocation9 + $0x4] sm:$0xf]
        %v409 = vld [vmem:[#allocation9 + $0x8] sm:$0xf]
        %v410 = vld [vmem:[#allocation9 + $0xc] sm:$0xf]
        %v411 = vld [vmem:[#allocation9 + $0x10] sm:$0xf]
        %v412 = vld [vmem:[#allocation9 + $0x14] sm:$0xf]
        %v413 = vld [vmem:[#allocation9 + $0x18] sm:$0xf]
        %v414 = vld [vmem:[#allocation9 + $0x1c] sm:$0xf]
        %v415 = vld [vmem:[#allocation9 + $0x20] sm:$0xf]
        %v416 = vld [vmem:[#allocation9 + $0x24] sm:$0xf]
        %v417 = vld [vmem:[#allocation9 + $0x28] sm:$0xf]
        %v418 = vld [vmem:[#allocation9 + $0x2c] sm:$0xf]
        %v419 = vld [vmem:[#allocation9 + $0x30] sm:$0xf]
        %v420 = vld [vmem:[#allocation9 + $0x34] sm:$0xf]
        %v421 = vld [vmem:[#allocation9 + $0x38] sm:$0xf]
        %v422 = vld [vmem:[#allocation9 + $0x3c] sm:$0xf]
        %v423 = vld [vmem:[%s5] sm:$0x1]
        %v425 = vlaneseq
        %v426 = vshrl.u32 %v425, 7
        %v427 = vsub.s32 0, %v426
        %v428 = vrot.slane %v423, %v427
        %v446 = vunpack.c.l.b16 %v407
        %v447 = vunpack.c.l.b16 %v408
        %v448 = vunpack.c.l.b16 %v409
        %v449 = vunpack.c.l.b16 %v410
        %v450 = vunpack.c.l.b16 %v411
        %v451 = vunpack.c.l.b16 %v412
        %v452 = vunpack.c.l.b16 %v413
        %v453 = vunpack.c.l.b16 %v414
        %v454 = vunpack.c.l.b16 %v415
        %v455 = vunpack.c.l.b16 %v416
        %v456 = vunpack.c.l.b16 %v417
        %v457 = vunpack.c.l.b16 %v418
        %v458 = vunpack.c.l.b16 %v419
        %v459 = vunpack.c.l.b16 %v420
        %v460 = vunpack.c.l.b16 %v421
        %v461 = vunpack.c.l.b16 %v422
        %v462 = vpack.c.b16 %v447, %v446
        %v463 = vpack.c.b16 %v449, %v448
        %v464 = vpack.c.b16 %v451, %v450
        %v465 = vpack.c.b16 %v453, %v452
        %v466 = vpack.c.b16 %v455, %v454
        %v467 = vpack.c.b16 %v457, %v456
        %v468 = vpack.c.b16 %v459, %v458
        %v469 = vpack.c.b16 %v461, %v460
        %478 = vmatprep.subr.bf16.mxu0 0
        %479 = vmatpush1.bf16.msra.mxu0 %v462
        %480 = vmatprep.subr.bf16.mxu0 0
        %481 = vmatpush1.bf16.msra.mxu0 %v463
        %482 = vmatprep.subr.bf16.mxu0 0
        %483 = vmatpush1.bf16.msra.mxu0 %v464
        %484 = vmatprep.subr.bf16.mxu0 0
        %485 = vmatpush1.bf16.msra.mxu0 %v465
        %486 = vmatprep.subr.bf16.mxu0 0
        %487 = vmatpush1.bf16.msra.mxu0 %v466
        %488 = vmatprep.subr.bf16.mxu0 0
        %489 = vmatpush1.bf16.msra.mxu0 %v467
        %490 = vmatprep.subr.bf16.mxu0 0
        %491 = vmatpush1.bf16.msra.mxu0 %v468
        %492 = vmatprep.subr.bf16.mxu0 0
        %493 = vmatpush1.bf16.msra.mxu0 %v469
        %494 = vmatprep.subr.bf16.mxu0 0
        %495 = vmatpush1.bf16.msra.mxu0 0
        %496 = vmatprep.subr.bf16.mxu0 0
        %497 = vmatpush1.bf16.msra.mxu0 0
        %498 = vmatprep.subr.bf16.mxu0 0
        %499 = vmatpush1.bf16.msra.mxu0 0
        %500 = vmatprep.subr.bf16.mxu0 0
        %501 = vmatpush1.bf16.msra.mxu0 0
        %502 = vmatprep.subr.bf16.mxu0 0
        %503 = vmatpush1.bf16.msra.mxu0 0
        %504 = vmatprep.subr.bf16.mxu0 0
        %505 = vmatpush1.bf16.msra.mxu0 0
        %506 = vmatprep.subr.bf16.mxu0 0
        %507 = vmatpush1.bf16.msra.mxu0 0
        %508 = vmatprep.subr.bf16.mxu0 0
        %509 = vmatpush1.bf16.msra.mxu0 0
        %510 = vmatprep.mubr.bf16.mxu0 0
        %511 = vmatmul.mubr.bf16.gmra.mrb[0].mxu0 %v406
        %v512 = vpop.f32.mrb[0].mxu0
        %v513 = vadd.f32 %v428, %v512
        %v514 = vpop.f32.mrb[0].mxu0
        %v515 = vpop.f32.mrb[0].mxu0
        %v516 = vpop.f32.mrb[0].mxu0
        %517 = vdwg.mxu0
        %v518 = vmax.f32 %v513, 0.0
        %v519 = vxor.u32 %v283, 1013904242
        %v520 = vshrl.u32 %v519, 16
        %v521 = vxor.u32 %v519, %v520
        %v522 = vmul.u32 %v521, 2146121005
        %v523 = vshrl.u32 %v522, 15
        %v524 = vxor.u32 %v522, %v523
        %vm525 = vcmp.ge.u32.totalorder %v524, 2147483648
        %v526 = vmul.f32 %v518, 2.0
        %v527 = vsel %vm525, %v526, 0.0
        %v528 = vpack.c.bf16 %v527, %v527
        %529 = vst [vmem:[%s270] sm:$0xf] %v528
        %s530 = sand.u32 %s143, 1
        %s531 = scalar_lea.sflag [#allocation6], %s530
        %s532 = sand.u32 %s143, 1
        %s533 = smul.addr %s532, 4
        %s534 = scalar_lea.vmem [#allocation10], %s533
        // Predicated region
        $region53: #{tpu_custom_call.1} parent=39 // pred_check
          %p535 = pneg %p153
        $region54: #{tpu_custom_call.1} parent=39 // pred_check_branch
          %537 = sbr.rel (%p535) target = $region56
        $region55: #{tpu_custom_call.1} parent=39 // pred_region
          %s539 = ssub.s32 64, 64
          %540 = vsyncadd %s531, %s539
          %s541 = smul.addr %s25, 64
          %s542 = scalar_lea.hbm %s6, %s541
          %s544 = sshll.u32 %s534, 4
          %s545 = int_to_ptr.vmem [resolvable:$true] %s544
          %547 = dma.vmem_to_hbm [thread:$0]  %s545, 64, %s542, %s531
        $region56: #{tpu_custom_call.1} parent=39 // pred_fallthru
          _
      $region40: #{tpu_custom_call.1} parent=5 // pred_fallthru
        _
      %p548 = scmp.le.s32.totalorder 2, %s20
      // Predicated region
      $region57: #{tpu_custom_call.1} parent=5 // pred_check
        %p549 = pneg %p548
      $region58: #{tpu_custom_call.1} parent=5 // pred_check_branch
        %551 = sbr.rel (%p549) target = $region60
      $region59: #{tpu_custom_call.1} parent=5 // pred_region
        %s552 = ssub.s32 %s20, 2
        // Predicated region
        $region61: #{tpu_custom_call.1} parent=59 // pred_check
          %p553 = pneg %p159
        $region62: #{tpu_custom_call.1} parent=59 // pred_check_branch
          %555 = sbr.rel (%p553) target = $region64
        $region63: #{tpu_custom_call.1} parent=59 // pred_region
          %s556 = sand.u32 %s144, 1
          %s557 = scalar_lea.sflag [#allocation6], %s556
          %s558 = sand.u32 %s144, 1
          %s559 = smul.addr %s558, 4
          %s560 = scalar_lea.vmem [#allocation10], %s559
          %561 = dma.done %s557, 64
        $region64: #{tpu_custom_call.1} parent=59 // pred_fallthru
          _
      $region60: #{tpu_custom_call.1} parent=5 // pred_fallthru
        _
    $region6: #{tpu_custom_call.1} parent=1 // loop_footer
      %s24 = sadd.s32 1, %s20
    $region7: #{tpu_custom_call.1} parent=1 // loop_footer_branch
      %19 = sbr.rel target = $region3
    $region8: #{tpu_custom_call.1} parent=1 // loop_exit
      _
    %562 = vsyncpa [#allocation5], 1
    %s563 = scalar_lea.sflag [#allocation5], 1
    %564 = vsyncpa %s563, 1
    %565 = vsyncpa [#allocation8], 1
    %566 = vsyncpa [#allocation6], 1
    %s567 = scalar_lea.sflag [#allocation6], 1
    %568 = vsyncpa %s567, 1

</llo_original>
